<compile_context>
chip_gen: v6e
topology: v6e:2x2x1
jax: 0.10.0
libtpu: 0.0.40
codegen_flags: <defaults>
</compile_context>

<pallas_src>
import jax
import jax.numpy as jnp
from jax.experimental import pallas as pl
from jax.experimental.pallas import tpu as pltpu


def _round_up(v, m):
    return ((v + m - 1) // m) * m


def _linear_kernel(x_ref, w_ref, b_ref, o_ref):
    # One whole-K MXU dot per tile.  Activation tile is cast to the weight
    # dtype (bf16) in-register; accumulation is f32; bias add + cast happen
    # once per output tile.
    acc = jnp.dot(x_ref[...].astype(w_ref.dtype), w_ref[...],
                  preferred_element_type=jnp.float32)
    o_ref[...] = (acc + b_ref[...]).astype(o_ref.dtype)


def linear_pallas(x, w, b, *, tm=512, tn=256, compute_dtype=jnp.bfloat16,
                  w_resident_budget_bytes=16 * 1024 * 1024):
    """y = x @ w + b with x:(M, K), w:(K, N), b:(N,).  Output dtype = x.dtype."""
    M, K = x.shape
    Kw, N = w.shape
    assert K == Kw, (K, Kw)

    # Weights: cast once (resident, read once).  Bias kept in f32 for the add.
    wc = w.astype(compute_dtype) if compute_dtype is not None else w
    b2 = b.reshape(1, N).astype(jnp.float32)

    x_item = jnp.dtype(x.dtype).itemsize
    w_item = jnp.dtype(wc.dtype).itemsize
    o_item = x_item

    # Row tile: full-extent single block for small M (no padding needed, any M
    # is legal as a full-extent dim); otherwise 8-aligned TM with a masked
    # partial last block handled by Pallas.
    tm_eff = M if M <= tm else tm
    grid_m = pl.cdiv(M, tm_eff)

    resident = (K * N * w_item + N * 4) <= w_resident_budget_bytes

    if resident:
        # 1-D grid over rows only.  W/bias index maps are constant -> DMA'd
        # once and kept VMEM-resident; x is read from HBM exactly once.
        grid = (grid_m,)
        in_specs = [
            pl.BlockSpec((tm_eff, K), lambda i: (i, 0)),   # x: streamed once
            pl.BlockSpec((K, N), lambda i: (0, 0)),        # W: resident
            pl.BlockSpec((1, N), lambda i: (0, 0)),        # bias: resident
        ]
        out_specs = pl.BlockSpec((tm_eff, N), lambda i: (i, 0))
        dims = ("parallel",)
        n_blk = N
        w_reads = 1
        out_shape = jax.ShapeDtypeStruct((M, N), x.dtype)
    else:
        # Fallback for very large output dims: 2-D (M, N) grid, still whole-K.
        # N (inner, fastest) varies first, so the x block index is unchanged
        # across the inner sweep -> x is still read from HBM only once.
        tn_eff = min(tn, _round_up(N, 128))
        Np = _round_up(N, tn_eff)
        if Np != N:  # pad weights/bias only (static, one-time); never pad x.
            wc = jnp.pad(wc, ((0, 0), (0, Np - N)))
            b2 = jnp.pad(b2, ((0, 0), (0, Np - N)))
        grid = (grid_m, Np // tn_eff)
        in_specs = [
            pl.BlockSpec((tm_eff, K), lambda i, j: (i, 0)),
            pl.BlockSpec((K, tn_eff), lambda i, j: (0, j)),
            pl.BlockSpec((1, tn_eff), lambda i, j: (0, j)),
        ]
        out_specs = pl.BlockSpec((tm_eff, tn_eff), lambda i, j: (i, j))
        dims = ("parallel", "parallel")
        n_blk = tn_eff
        w_reads = grid_m
        out_shape = jax.ShapeDtypeStruct((M, Np), x.dtype)

    # VMEM budget: double-buffered x/out tiles + resident (or per-tile) W/bias.
    need = (2 * tm_eff * K * x_item
            + 2 * tm_eff * n_blk * o_item
            + K * n_blk * w_item + n_blk * 4)
    vmem_limit = int(min(max(need * 3 // 2, 32 * 1024 * 1024),
                         64 * 1024 * 1024))

    bytes_accessed = (M * K * x_item                 # x read once
                      + w_reads * wc.size * w_item   # W (resident: once)
                      + w_reads * b2.size * 4        # bias
                      + M * N * o_item)              # output written once

    out = pl.pallas_call(
        _linear_kernel,
        out_shape=out_shape,
        grid=grid,
        in_specs=in_specs,
        out_specs=out_specs,
        compiler_params=pltpu.CompilerParams(
            dimension_semantics=dims,
            vmem_limit_bytes=vmem_limit,
        ),
        cost_estimate=pl.CostEstimate(
            flops=2 * M * K * N,
            transcendentals=0,
            bytes_accessed=int(bytes_accessed),
        ),
    )(x, wc, b2)

    if out.shape[1] != N:
        out = out[:, :N]
    return out


def gnn_mlp_forward(params, x):
    """GNNMLP.forward(x): Linear(hidden_dim, output_dim) over the last axis."""
    lead = x.shape[:-1]
    h = x.reshape(-1, x.shape[-1])          # no dtype cast: stream native dtype
    y = linear_pallas(h, params["w"], params["b"])
    return y.reshape(*lead, y.shape[-1])


def init_gnn_mlp_params(key, hidden_dim, output_dim):
    """Mirror torch.nn.Linear(hidden_dim, output_dim) init: U(-1/sqrt(in), 1/sqrt(in)).
    Weight stored already transposed as (in, out) so the kernel computes x @ w + b."""
    kw, kb = jax.random.split(key)
    bound = 1.0 / jnp.sqrt(jnp.float32(hidden_dim))
    w = jax.random.uniform(kw, (hidden_dim, output_dim), jnp.float32, -bound, bound)
    b = jax.random.uniform(kb, (output_dim,), jnp.float32, -bound, bound)
    return {"w": w, "b": b}


if __name__ == "__main__":
    key = jax.random.PRNGKey(0)
    k_x, k_p = jax.random.split(key)

    hidden_dim = 32
    output_dim = 64
    batch, seq = 2, 16

    x = jax.random.normal(k_x, (batch, seq, hidden_dim), dtype=jnp.float32)
    params = init_gnn_mlp_params(k_p, hidden_dim, output_dim)

    out = gnn_mlp_forward(params, x)
    out = jax.block_until_ready(out)
    assert out.shape == (batch, seq, output_dim)
    out2 = out.reshape(-1, output_dim)

    x2 = x.reshape(-1, hidden_dim)
    # Reference with identical numerics (bf16 operands, f32 accumulation).
    ref_bf16 = jnp.dot(x2.astype(jnp.bfloat16), params["w"].astype(jnp.bfloat16),
                       preferred_element_type=jnp.float32) + params["b"]
    # Pure-f32 reference (semantic check, looser tolerance for bf16 operands).
    ref_f32 = x2 @ params["w"] + params["b"]

    assert jnp.allclose(out2, ref_bf16, atol=1e-4, rtol=1e-4)
    assert jnp.allclose(out2, ref_f32, atol=5e-2, rtol=5e-2)

    print("KERNEL_OK")
</pallas_src>

<mosaic_0001>
module attributes {stable_mosaic.version = 11 : i64} {
  func.func @_linear_kernel(%arg0: i32, %arg1: memref<32x32xf32, #tpu.memory_space<vmem>>, %arg2: memref<32x64xbf16, #tpu.memory_space<vmem>>, %arg3: memref<1x64xf32, #tpu.memory_space<vmem>>, %arg4: memref<32x64xf32, #tpu.memory_space<vmem>>) attributes {dimension_semantics = [#tpu.dimension_semantics<parallel>], iteration_bounds = array<i64: 1>, scalar_prefetch = 0 : i64, scratch_operands = 0 : i64, tpu.core_type = #tpu.core_type<tc>, window_params = [{transform_indices = @transform_0, window_bounds = array<i64: 32, 32>}, {pipeline_mode = #tpu.pipeline_mode<synchronous>, transform_indices = @transform_1, window_bounds = array<i64: 32, 64>}, {pipeline_mode = #tpu.pipeline_mode<synchronous>, transform_indices = @transform_2, window_bounds = array<i64: 1, 64>}, {transform_indices = @transform_3, window_bounds = array<i64: 32, 64>}]} {
    %c0 = arith.constant 0 : index
    %c0_0 = arith.constant 0 : index
    %0 = vector.load %arg1[%c0, %c0_0] : memref<32x32xf32, #tpu.memory_space<vmem>>, vector<32x32xf32>
    %1 = arith.truncf %0 : vector<32x32xf32> to vector<32x32xbf16>
    %c0_1 = arith.constant 0 : index
    %c0_2 = arith.constant 0 : index
    %2 = vector.load %arg2[%c0_1, %c0_2] : memref<32x64xbf16, #tpu.memory_space<vmem>>, vector<32x64xbf16>
    %cst = arith.constant dense<0.000000e+00> : vector<32x64xf32>
    %3 = tpu.matmul %1, %2, %cst {dimension_numbers = #tpu.dot_dimension_numbers<[1], [0], [0], [1], [0, 0, 1, 1], [], []>} : vector<32x32xbf16>, vector<32x64xbf16>, vector<32x64xf32> -> vector<32x64xf32>
    %c0_3 = arith.constant 0 : index
    %c0_4 = arith.constant 0 : index
    %4 = vector.load %arg3[%c0_3, %c0_4] : memref<1x64xf32, #tpu.memory_space<vmem>>, vector<1x64xf32>
    %5 = vector.broadcast %4 : vector<1x64xf32> to vector<32x64xf32>
    %6 = arith.addf %3, %5 : vector<32x64xf32>
    %c0_5 = arith.constant 0 : index
    %c0_6 = arith.constant 0 : index
    %7 = vector.load %arg4[%c0_5, %c0_6] : memref<32x64xf32, #tpu.memory_space<vmem>>, vector<32x64xf32>
    tpu.vector_store %arg4[%c0_5, %c0_6], %6 {strides = array<i32>} : memref<32x64xf32, #tpu.memory_space<vmem>>, vector<32x64xf32>,
    return
  }
  func.func @transform_0(%arg0: i32) -> (i32, i32) {
    %c0_i32 = arith.constant 0 : i32
    %c0_i32_0 = arith.constant 0 : i32
    return %arg0, %c0_i32 : i32, i32
  }
  func.func @transform_1(%arg0: i32) -> (i32, i32) {
    %c0_i32 = arith.constant 0 : i32
    %c0_i32_0 = arith.constant 0 : i32
    %c0_i32_1 = arith.constant 0 : i32
    return %c0_i32, %c0_i32_0 : i32, i32
  }
  func.func @transform_2(%arg0: i32) -> (i32, i32) {
    %c0_i32 = arith.constant 0 : i32
    %c0_i32_0 = arith.constant 0 : i32
    %c0_i32_1 = arith.constant 0 : i32
    return %c0_i32, %c0_i32_0 : i32, i32
  }
  func.func @transform_3(%arg0: i32) -> (i32, i32) {
    %c0_i32 = arith.constant 0 : i32
    %c0_i32_0 = arith.constant 0 : i32
    return %arg0, %c0_i32 : i32, i32
  }
}

</mosaic_0001>

<llo_original>
// kernel: tpu_custom_call.1
$region0: #{tpu_custom_call.1}
  #allocation0 [shape = 'u32[]', space=smem, size = 0x4, offset = 0x4, fixed_abs, tag = 'smem constant byte address 0x4 - core index']
  #allocation1 [shape = 'u32[144,128]{1,0:T(1,128)}', space=vmem, size = 0x12000, scoped, tag = 'internal scratch']
  %s0 = inlined_call_operand.hbm [shape: f32[32,32], index: 0, kind: input, shape index: {}]
  %s1 = inlined_call_operand.hbm [shape: bf16[32,64], index: 1, kind: input, shape index: {}]
  %s2 = inlined_call_operand.vmem [shape: f32[1,64], index: 2, kind: input, shape index: {}]
  %s3 = inlined_call_operand.hbm [shape: f32[32,64], index: 3, kind: output, shape index: {}]
  %s4 = sld [smem:[#allocation0]]
  $region30: #{tpu_custom_call.1} parent=0
    _
  %s6 = ssub.s32 1, %s4
  %s7 = scalar_select 0, %s6, %s4
  $region1: #{tpu_custom_call.1} parent=0
    #allocation2 [shape = 'u8[16384]{0}', space=vmem, size = 0x4000, scoped, tag = 'input window, operand 0, single buffered']
    #allocation3 [shape = 's32[1]{0}', space=sflag, size = 0x4, scoped, tag = 'scoped memory for tpu_custom_call.1']
    #allocation4 [shape = 's32[1]{0}', space=sflag, size = 0x4, scoped, tag = 'scoped memory for tpu_custom_call.1']
    #allocation5 [shape = 'u8[8192]{0}', space=vmem, size = 0x2000, scoped, tag = 'input window, operand 1, single buffered']
    #allocation6 [shape = 's32[1]{0}', space=sflag, size = 0x4, scoped, tag = 'scoped memory for tpu_custom_call.1']
    #allocation7 [shape = 'u8[16384]{0}', space=vmem, size = 0x4000, scoped, tag = 'output window, operand 0, single buffered']
    %8 = vsyncpa [#allocation3], 0
    %9 = vsyncpa [#allocation6], 0
    %10 = vsyncpa [#allocation4], 0
    // Predicated region
    $region2: #{tpu_custom_call.1} parent=1 // pred_check
      _
    $region3: #{tpu_custom_call.1} parent=1 // pred_check_branch
      %12 = sbr.rel (0) target = $region5
    $region4: #{tpu_custom_call.1} parent=1 // pred_region
      %s14 = ssub.s32 512, 512
      %15 = vsyncadd [#allocation3], %s14
      %s16 = sshll.u32 [#allocation2], 4
      %s17 = int_to_ptr.vmem [resolvable:$true] %s16
      %22 = dma.hbm_to_vmem [thread:$0]  %s0, 512, %s17, [#allocation3], 128, 128, 8
    $region5: #{tpu_custom_call.1} parent=1 // pred_fallthru
      _
    // Predicated region
    $region6: #{tpu_custom_call.1} parent=1 // pred_check
      _
    $region7: #{tpu_custom_call.1} parent=1 // pred_check_branch
      %24 = sbr.rel (0) target = $region9
    $region8: #{tpu_custom_call.1} parent=1 // pred_region
      %s26 = ssub.s32 256, 256
      %27 = vsyncadd [#allocation6], %s26
      %s28 = sshll.u32 [#allocation5], 4
      %s29 = int_to_ptr.vmem [resolvable:$true] %s28
      %34 = dma.hbm_to_vmem [thread:$0]  %s1, 256, %s29, [#allocation6], 64, 64, 4
    $region9: #{tpu_custom_call.1} parent=1 // pred_fallthru
      _
    // Predicated region
    $region10: #{tpu_custom_call.1} parent=1 // pred_check
      _
    $region11: #{tpu_custom_call.1} parent=1 // pred_check_branch
      %36 = sbr.rel (0) target = $region13
    $region12: #{tpu_custom_call.1} parent=1 // pred_region
      _
    $region13: #{tpu_custom_call.1} parent=1 // pred_fallthru
      _
    // Predicated region
    $region14: #{tpu_custom_call.1} parent=1 // pred_check
      _
    $region15: #{tpu_custom_call.1} parent=1 // pred_check_branch
      %38 = sbr.rel (0) target = $region17
    $region16: #{tpu_custom_call.1} parent=1 // pred_region
      %39 = dma.done [#allocation3], 512
    $region17: #{tpu_custom_call.1} parent=1 // pred_fallthru
      _
    // Predicated region
    $region18: #{tpu_custom_call.1} parent=1 // pred_check
      _
    $region19: #{tpu_custom_call.1} parent=1 // pred_check_branch
      %41 = sbr.rel (0) target = $region21
    $region20: #{tpu_custom_call.1} parent=1 // pred_region
      %42 = dma.done [#allocation6], 256
    $region21: #{tpu_custom_call.1} parent=1 // pred_fallthru
      _
    %v44 = vld [vmem:[#allocation2] sm:$0xff]
    %v45 = vld [vmem:[#allocation2 + $0x8] sm:$0xff]
    %v46 = vld [vmem:[#allocation2 + $0x10] sm:$0xff]
    %v47 = vld [vmem:[#allocation2 + $0x18] sm:$0xff]
    %v48 = vpack.c.bf16 %v45, %v44
    %v49 = vpack.c.bf16 %v47, %v46
    %v50 = vld [vmem:[#allocation5] sm:$0xf]
    %v51 = vld [vmem:[#allocation5 + $0x4] sm:$0xf]
    %v52 = vld [vmem:[#allocation5 + $0x8] sm:$0xf]
    %v53 = vld [vmem:[#allocation5 + $0xc] sm:$0xf]
    %v54 = vld [vmem:[%s2] sm:$0x1]
    %v56 = vlaneseq
    %v57 = vshrl.u32 %v56, 7
    %v58 = vsub.s32 0, %v57
    %v59 = vrot.slane %v54, %v58
    %v65 = vunpack.c.l.b16 %v50
    %v66 = vunpack.c.l.b16 %v51
    %v67 = vunpack.c.l.b16 %v52
    %v68 = vunpack.c.l.b16 %v53
    %v69 = vpack.c.b16 %v66, %v65
    %v70 = vpack.c.b16 %v68, %v67
    %vm73 = vcmask 261120
    %v75 = vsel %vm73, %v48, 0
    %v78 = vsel %vm73, %v49, 0
    %80 = vmatprep.subr.bf16.mxu0 0
    %81 = vmatpush1.bf16.msra.mxu0 0
    %82 = vmatprep.subr.bf16.mxu0 0
    %83 = vmatpush1.bf16.msra.mxu0 0
    %84 = vmatprep.subr.bf16.mxu0 0
    %85 = vmatpush1.bf16.msra.mxu0 0
    %86 = vmatprep.subr.bf16.mxu0 0
    %87 = vmatpush1.bf16.msra.mxu0 0
    %88 = vmatprep.subr.bf16.mxu0 0
    %89 = vmatpush1.bf16.msra.mxu0 0
    %90 = vmatprep.subr.bf16.mxu0 0
    %91 = vmatpush1.bf16.msra.mxu0 0
    %92 = vmatprep.subr.bf16.mxu0 0
    %93 = vmatpush1.bf16.msra.mxu0 %v70
    %94 = vmatprep.subr.bf16.mxu0 0
    %95 = vmatpush1.bf16.msra.mxu0 %v69
    %96 = vmatprep.subr.bf16.mxu0 0
    %97 = vmatpush2.bf16.msra.mxu0 0
    %98 = vmatprep.subr.bf16.mxu0 0
    %99 = vmatpush2.bf16.msra.mxu0 0
    %100 = vmatprep.subr.bf16.mxu0 0
    %101 = vmatpush2.bf16.msra.mxu0 0
    %102 = vmatprep.subr.bf16.mxu0 0
    %103 = vmatpush2.bf16.msra.mxu0 0
    %104 = vmatprep.subr.bf16.mxu0 0
    %105 = vmatpush2.bf16.msra.mxu0 0
    %106 = vmatprep.subr.bf16.mxu0 0
    %107 = vmatpush2.bf16.msra.mxu0 0
    %108 = vmatprep.subr.bf16.mxu0 0
    %109 = vmatpush2.bf16.msra.mxu0 0
    %110 = vmatprep.subr.bf16.mxu0 0
    %111 = vmatpush2.bf16.msra.mxu0 0
    %112 = vmatprep.mubr.bf16.mxu0 0
    %113 = vmatmul.mubr.bf16.gmra.mxu0 %v75
    %v114 = vpop.f32.mrf.mxu0
    %v115 = vadd.f32 %v59, %v114
    %v116 = vpop.f32.mrf.mxu0
    %v117 = vpop.f32.mrf.mxu0
    %v118 = vadd.f32 %v59, %v117
    %v119 = vpop.f32.mrf.mxu0
    %120 = vmatprep.mubr.bf16.mxu0 0
    %121 = vmatmul.mubr.bf16.gmra.mxu0 %v78
    %v122 = vpop.f32.mrf.mxu0
    %v123 = vadd.f32 %v59, %v122
    %v124 = vpop.f32.mrf.mxu0
    %v125 = vpop.f32.mrf.mxu0
    %v126 = vadd.f32 %v59, %v125
    %v127 = vpop.f32.mrf.mxu0
    %128 = vdwg.mxu0
    %vm129 = vcmask 523264
    %130 = vst.msk [vmem:[#allocation7] sm:$0xff] %vm129, %v115
    %131 = vst.msk [vmem:[#allocation7 + $0x8] sm:$0xff] %vm129, %v118
    %132 = vst.msk [vmem:[#allocation7 + $0x10] sm:$0xff] %vm129, %v123
    %133 = vst.msk [vmem:[#allocation7 + $0x18] sm:$0xff] %vm129, %v126
    // Predicated region
    $region22: #{tpu_custom_call.1} parent=1 // pred_check
      _
    $region23: #{tpu_custom_call.1} parent=1 // pred_check_branch
      %135 = sbr.rel (0) target = $region25
    $region24: #{tpu_custom_call.1} parent=1 // pred_region
      %s137 = ssub.s32 512, 512
      %138 = vsyncadd [#allocation4], %s137
      %s139 = sshll.u32 [#allocation7], 4
      %s140 = int_to_ptr.vmem [resolvable:$true] %s139
      %145 = dma.vmem_to_hbm [thread:$0]  %s140, 512, %s3, [#allocation4], 128, 128, 8
    $region25: #{tpu_custom_call.1} parent=1 // pred_fallthru
      _
    // Predicated region
    $region26: #{tpu_custom_call.1} parent=1 // pred_check
      _
    $region27: #{tpu_custom_call.1} parent=1 // pred_check_branch
      %147 = sbr.rel (0) target = $region29
    $region28: #{tpu_custom_call.1} parent=1 // pred_region
      %148 = dma.done [#allocation4], 512
    $region29: #{tpu_custom_call.1} parent=1 // pred_fallthru
      _
    %149 = vsyncpa [#allocation3], 1
    %150 = vsyncpa [#allocation6], 1
    %151 = vsyncpa [#allocation4], 1

</llo_original>
